<compile_context>
chip_gen: v5e
topology: v5e:2x2
jax: 0.10.0
libtpu: 0.0.40
codegen_flags: <defaults>
</compile_context>

<pallas_src>
import functools

import jax
import jax.numpy as jnp
from jax import lax
from jax.experimental import pallas as pl
from jax.experimental.pallas import tpu as pltpu


_LANE = 128


def _round_up(x, m):
    return ((x + m - 1) // m) * m


def _residual_fc_add_kernel(h_ref, hp_ref, w_ref, o_ref):
    # out = h + h_prev @ W, with W stored (in_dim, out_dim) -> canonical MXU contraction.
    acc = lax.dot_general(
        hp_ref[...],
        w_ref[...],
        dimension_numbers=(((1,), (0,)), ((), ())),
        preferred_element_type=jnp.float32,
    )
    o_ref[...] = (h_ref[...].astype(jnp.float32) + acc).astype(o_ref.dtype)


@functools.lru_cache(maxsize=None)
def _vmem_budget_and_cap():
    """Return (tile-planning budget, physical-VMEM estimate) in bytes, per TPU generation."""
    cap = 64 * 1024 * 1024                       # conservative fallback (v7x per-TC VMEM)
    try:
        cap = int(pltpu.get_tpu_info().vmem_capacity_bytes)
    except Exception:
        pass
    # ~70% of physical for pipeline buffers + resident W, capped at 64 MiB:
    #   v5e/v6e (128 MiB) -> 64 MiB budget;  v7x (64 MiB per TC) -> ~45 MiB budget.
    budget = min(int(cap * 0.7), 64 * 1024 * 1024)
    return budget, cap


def _pick_tile_rows(n, d, in_itemsize, out_itemsize, budget):
    """Largest row tile that fits the VMEM budget, multiple of the sublane granule, and
    yielding an even grid of >= 2 steps (v7x megacore balance + DMA/compute overlap)."""
    granule = max(8, 32 // min(in_itemsize, out_itemsize))   # 8 (f32) / 16 (bf16) sublanes
    if n <= granule:
        return n                                  # single full-extent block (always legal)
    per_row = 2 * 2 * d * in_itemsize + 2 * d * out_itemsize  # double-buffered h, h_prev, out
    avail = budget - d * d * in_itemsize          # resident W, single-buffered
    tm = avail // per_row if avail > 0 else 0
    # TODO(synk): if avail <= 0 (W alone exceeds the budget, d >~ 3.4K f32 on v7x) this falls
    # back to granule-sized tiles; a K-axis split with an f32 scratch accumulator would be
    # needed to stay near the roofline in that regime.
    tm = int(min(tm, 1024))                       # ~85%+ of HBM roofline by 512-1024 rows
    tm = max(granule, (tm // granule) * granule)
    # Force an even number (>= 2) of grid steps.
    steps = pl.cdiv(n, tm)
    if steps == 1:
        steps = 2
    if steps % 2:
        steps += 1
    tm = max(granule, _round_up(pl.cdiv(n, steps), granule))
    return tm


@functools.partial(jax.jit, static_argnames=("out_dtype",))
def _residual_fc_add(h2d, hp2d, w, *, out_dtype):
    """h2d, hp2d: (N, Dp); w: (Dp, Dp) in (in_dim, out_dim) layout -> (N, Dp)."""
    n, d = h2d.shape
    in_isz = jnp.dtype(h2d.dtype).itemsize
    out_isz = jnp.dtype(out_dtype).itemsize
    w_isz = jnp.dtype(w.dtype).itemsize

    budget, cap = _vmem_budget_and_cap()
    tm = _pick_tile_rows(n, d, in_isz, out_isz, budget)
    grid = (pl.cdiv(n, tm),)

    vmem_need = (2 * 2 * tm * d * in_isz) + (2 * tm * d * out_isz) + d * d * w_isz
    vmem_limit = min(int(cap * 0.9), max(budget, vmem_need) + (8 << 20))

    cost = pl.CostEstimate(
        flops=2 * n * d * d,
        transcendentals=0,
        bytes_accessed=2 * n * d * in_isz + n * d * out_isz + d * d * w_isz,
    )

    return pl.pallas_call(
        _residual_fc_add_kernel,
        out_shape=jax.ShapeDtypeStruct((n, d), out_dtype),
        grid_spec=pl.GridSpec(
            grid=grid,
            in_specs=[
                pl.BlockSpec((tm, d), lambda i: (i, 0)),   # h      (row tiles)
                pl.BlockSpec((tm, d), lambda i: (i, 0)),   # h_prev (row tiles)
                # W is grid-invariant: keep it resident with a single pipeline buffer.
                pl.BlockSpec((d, d), lambda i: (0, 0), pipeline_mode=pl.Buffered(1)),
            ],
            out_specs=pl.BlockSpec((tm, d), lambda i: (i, 0)),
        ),
        compiler_params=pltpu.CompilerParams(
            dimension_semantics=("parallel",),             # v7x: shard row tiles over 2 TCs
            vmem_limit_bytes=vmem_limit,
        ),
        cost_estimate=cost,
        # NOTE: no input_output_aliases — without caller-side donation it would only force a
        # defensive copy of h, which hurts this HBM-bandwidth-bound kernel.
    )(h2d, hp2d, w)


class ResidualConnectionWeighted:
    """JAX/Pallas port of graphium's ResidualConnectionWeighted.

    With the default constructor arguments (activation='none', dropout=0.0,
    normalization='none', bias=False) each FCLayer in the residual list is a plain
    bias-free Linear(d, d); the fused (matmul + add) runs in a Pallas TPU kernel.
    """

    h_dim_increase_type = None
    has_weights = True

    def __init__(self, out_dims, skip_steps: int = 1, seed: int = 0,
                 compute_dtype=jnp.float32):
        self.skip_steps = skip_steps
        self.out_dims = list(out_dims)
        self.skip_count = 0
        self.compute_dtype = jnp.dtype(compute_dtype)
        # nn.Linear-style init: uniform(-1/sqrt(d), 1/sqrt(d)).  Weights are stored
        # pre-transposed (in_dim, out_dim) and zero-padded to a multiple of 128 so the
        # kernel contraction is canonical and the output stays lane-dense.
        self.dims = []       # (d, d_padded) per residual layer
        self.weights = []    # (Dp, Dp), compute_dtype, (in, out) layout, zero-padded
        key = jax.random.PRNGKey(seed)
        for ii in range(0, len(self.out_dims) - 1, self.skip_steps):
            d = self.out_dims[ii]
            dp = _round_up(d, _LANE)
            key, sub = jax.random.split(key)
            bound = 1.0 / float(d) ** 0.5
            w = jax.random.uniform(sub, (d, d), jnp.float32, -bound, bound)
            wp = jnp.zeros((dp, dp), jnp.float32).at[:d, :d].set(w)
            self.dims.append((d, dp))
            self.weights.append(wp.astype(self.compute_dtype))
        # TODO(synk): dropout / activation / normalization inside FCLayer are identity for
        # the default config and are not emitted; non-default configs would need extra
        # elementwise ops in the kernel body.

    def _bool_apply_skip_step(self, step_idx: int) -> bool:
        return (
            self.skip_steps != 0
            and step_idx % self.skip_steps == 0
            and self.skip_count < len(self.weights)
        )

    def forward(self, h, h_prev, step_idx: int):
        if self._bool_apply_skip_step(step_idx):
            if step_idx > 0:
                d, dp = self.dims[self.skip_count]
                w = self.weights[self.skip_count]
                lead = h.shape[:-1]
                out_dtype = h.dtype
                h2d = h.reshape(-1, d).astype(self.compute_dtype)
                hp2d = h_prev.reshape(-1, d).astype(self.compute_dtype)
                if dp != d:  # lane-dense insurance for feature dims not multiple of 128
                    pad = ((0, 0), (0, dp - d))
                    h2d = jnp.pad(h2d, pad)
                    hp2d = jnp.pad(hp2d, pad)
                out2d = _residual_fc_add(h2d, hp2d, w, out_dtype=out_dtype)
                if dp != d:
                    out2d = out2d[:, :d]
                h = out2d.reshape(*lead, d)
                self.skip_count += 1
            h_prev = h
        return h, h_prev

    def __call__(self, h, h_prev, step_idx: int):
        return self.forward(h, h_prev, step_idx)


def _reference_forward(weights, dims, h, h_prev, step_idx, skip_count, skip_steps=1):
    """Pure-JAX reference of a single forward step (for verification)."""
    applies = (skip_steps != 0 and step_idx % skip_steps == 0
               and skip_count < len(weights))
    if applies:
        if step_idx > 0:
            d, _ = dims[skip_count]
            w = weights[skip_count][:d, :d].astype(jnp.float32)
            h = h + jnp.einsum("...i,io->...o",
                               h_prev.astype(jnp.float32), w).astype(h.dtype)
            skip_count += 1
        h_prev = h
    return h, h_prev, skip_count


if __name__ == "__main__":
    key = jax.random.PRNGKey(0)
    # Small shapes; D=128 keeps the output slab lane-dense (full 128-lane vregs).
    B, S, D = 2, 8, 128
    out_dims = [D, D, D, D, D]    # all equal -> h_dim_increase_type None

    res = ResidualConnectionWeighted(out_dims, skip_steps=1, seed=0)

    k_h, k_loop = jax.random.split(key)
    h = jax.random.normal(k_h, (B, S, D), jnp.float32)

    # Simulate the architecture's forward loop over a few layers.
    h_prev = None
    ref_h, ref_hp, ref_sc = None, None, 0
    for step_idx in range(len(out_dims) - 1):
        if step_idx == 0:
            h_new = h
        else:
            k_loop, sub = jax.random.split(k_loop)
            h_new = jax.random.normal(sub, (B, S, D), jnp.float32)
        h, h_prev = res.forward(h_new, h_prev, step_idx)
        ref_h, ref_hp, ref_sc = _reference_forward(
            res.weights, res.dims, h_new, ref_hp, step_idx, ref_sc, res.skip_steps)

    jax.block_until_ready(h)
    jax.block_until_ready(h_prev)
    assert jnp.allclose(h, ref_h, atol=1e-5, rtol=1e-5), "mismatch vs reference (h)"
    assert jnp.allclose(h_prev, ref_hp, atol=1e-5, rtol=1e-5), "mismatch vs reference (h_prev)"

    # Optional bf16 storage/compute path (halves HBM traffic); loose-tolerance check.
    res_bf16 = ResidualConnectionWeighted(out_dims, skip_steps=1, seed=0,
                                          compute_dtype=jnp.bfloat16)
    h0, _ = res_bf16.forward(h, None, 0)              # step 0: just sets h_prev
    h1, _ = res_bf16.forward(ref_h, h0, 1)            # step 1: fused matmul-add in bf16
    jax.block_until_ready(h1)
    ref1 = ref_h + jnp.einsum("...i,io->...o", h0,
                              res_bf16.weights[0][:D, :D].astype(jnp.float32))
    assert jnp.allclose(h1, ref1, atol=0.5, rtol=0.1), "bf16 path mismatch"

    print("KERNEL_OK")
</pallas_src>

<mosaic_0001>
module attributes {stable_mosaic.version = 11 : i64} {
  func.func @_residual_fc_add_kernel(%arg0: i32, %arg1: memref<8x128xf32, #tpu.memory_space<vmem>>, %arg2: memref<8x128xf32, #tpu.memory_space<vmem>>, %arg3: memref<128x128xf32, #tpu.memory_space<vmem>>, %arg4: memref<8x128xf32, #tpu.memory_space<vmem>>) attributes {dimension_semantics = [#tpu.dimension_semantics<parallel>], iteration_bounds = array<i64: 2>, scalar_prefetch = 0 : i64, scratch_operands = 0 : i64, tpu.core_type = #tpu.core_type<tc>, window_params = [{transform_indices = @transform_0, window_bounds = array<i64: 8, 128>}, {transform_indices = @transform_1, window_bounds = array<i64: 8, 128>}, {pipeline_mode = #tpu.pipeline_mode<synchronous>, transform_indices = @transform_2, window_bounds = array<i64: 128, 128>}, {transform_indices = @transform_3, window_bounds = array<i64: 8, 128>}]} {
    %c0 = arith.constant 0 : index
    %c0_0 = arith.constant 0 : index
    %0 = vector.load %arg2[%c0, %c0_0] : memref<8x128xf32, #tpu.memory_space<vmem>>, vector<8x128xf32>
    %c0_1 = arith.constant 0 : index
    %c0_2 = arith.constant 0 : index
    %1 = vector.load %arg3[%c0_1, %c0_2] : memref<128x128xf32, #tpu.memory_space<vmem>>, vector<128x128xf32>
    %cst = arith.constant dense<0.000000e+00> : vector<8x128xf32>
    %2 = tpu.matmul %0, %1, %cst {dimension_numbers = #tpu.dot_dimension_numbers<[1], [0], [0], [1], [0, 0, 1, 1], [], []>} : vector<8x128xf32>, vector<128x128xf32>, vector<8x128xf32> -> vector<8x128xf32>
    %c0_3 = arith.constant 0 : index
    %c0_4 = arith.constant 0 : index
    %3 = vector.load %arg1[%c0_3, %c0_4] : memref<8x128xf32, #tpu.memory_space<vmem>>, vector<8x128xf32>
    %4 = arith.addf %3, %2 : vector<8x128xf32>
    %c0_5 = arith.constant 0 : index
    %c0_6 = arith.constant 0 : index
    %5 = vector.load %arg4[%c0_5, %c0_6] : memref<8x128xf32, #tpu.memory_space<vmem>>, vector<8x128xf32>
    tpu.vector_store %arg4[%c0_5, %c0_6], %4 {strides = array<i32>} : memref<8x128xf32, #tpu.memory_space<vmem>>, vector<8x128xf32>,
    return
  }
  func.func @transform_0(%arg0: i32) -> (i32, i32) {
    %c0_i32 = arith.constant 0 : i32
    %c0_i32_0 = arith.constant 0 : i32
    return %arg0, %c0_i32 : i32, i32
  }
  func.func @transform_1(%arg0: i32) -> (i32, i32) {
    %c0_i32 = arith.constant 0 : i32
    %c0_i32_0 = arith.constant 0 : i32
    return %arg0, %c0_i32 : i32, i32
  }
  func.func @transform_2(%arg0: i32) -> (i32, i32) {
    %c0_i32 = arith.constant 0 : i32
    %c0_i32_0 = arith.constant 0 : i32
    %c0_i32_1 = arith.constant 0 : i32
    return %c0_i32, %c0_i32_0 : i32, i32
  }
  func.func @transform_3(%arg0: i32) -> (i32, i32) {
    %c0_i32 = arith.constant 0 : i32
    %c0_i32_0 = arith.constant 0 : i32
    return %arg0, %c0_i32 : i32, i32
  }
}

</mosaic_0001>

<llo_original>
// kernel: _residual_fc_add.1
$region0: #{_residual_fc_add.1}
  #allocation0 [shape = 'u32[]', space=smem, size = 0x4, offset = 0x4, fixed_abs, tag = 'smem constant byte address 0x4 - core index']
  #allocation1 [shape = 'u32[72,128]{1,0:T(1,128)}', space=vmem, size = 0x9000, scoped, tag = 'internal scratch']
  %s0 = inlined_call_operand.hbm [shape: f32[16,128], index: 0, kind: input, shape index: {}]
  %s1 = inlined_call_operand.hbm [shape: f32[16,128], index: 1, kind: input, shape index: {}]
  %s2 = inlined_call_operand.hbm [shape: f32[128,128], index: 2, kind: input, shape index: {}]
  %s3 = inlined_call_operand.hbm [shape: f32[16,128], index: 3, kind: output, shape index: {}]
  %s4 = sld [smem:[#allocation0]]
  $region57: #{_residual_fc_add.1} parent=0
    _
  %s6 = ssub.s32 1, %s4
  %s7 = scalar_select 0, %s6, %s4
  $region1: #{_residual_fc_add.1} parent=0
    #allocation2 [shape = 'u8[8192]{0}', space=vmem, size = 0x2000, scoped, tag = 'input window, operand 0']
    #allocation3 [shape = 's32[2]{0}', space=sflag, size = 0x8, scoped, tag = 'scoped memory for _residual_fc_add.1']
    #allocation4 [shape = 's32[2]{0}', space=sflag, size = 0x8, scoped, tag = 'scoped memory for _residual_fc_add.1']
    #allocation5 [shape = 'u8[8192]{0}', space=vmem, size = 0x2000, scoped, tag = 'input window, operand 1']
    #allocation6 [shape = 's32[2]{0}', space=sflag, size = 0x8, scoped, tag = 'scoped memory for _residual_fc_add.1']
    #allocation7 [shape = 'u8[65536]{0}', space=vmem, size = 0x10000, scoped, tag = 'input window, operand 2, single buffered']
    #allocation8 [shape = 'u8[8192]{0}', space=vmem, size = 0x2000, scoped, tag = 'output window, operand 0']
    %8 = vsyncpa [#allocation3], 0
    %s9 = scalar_lea.sflag [#allocation3], 1
    %10 = vsyncpa %s9, 0
    %11 = vsyncpa [#allocation6], 0
    %s12 = scalar_lea.sflag [#allocation6], 1
    %13 = vsyncpa %s12, 0
    %14 = vsyncpa [#allocation4], 0
    %s15 = scalar_lea.sflag [#allocation4], 1
    %16 = vsyncpa %s15, 0
    loop: start=0, step=1, limit=4
    $region2: #{_residual_fc_add.1} parent=1 // loop_pre_header
      _
    $region3: #{_residual_fc_add.1} parent=1 // loop_header
      %s18 = sphi 0, %s22
      %p19 = scmp.ge.s32.totalorder %s18, 4
      %s28 = sphi 0, %s30
      %s31 = sphi 0, %s28
      %s32 = sphi 0, %s31
      %s48 = sphi 0, %s32
      %s54 = sphi 0, %s56
      %s57 = sphi 0, %s54
      %s58 = sphi 0, %s57
      %s74 = sphi 0, %s58
      %s78 = sphi 0, %s78
      %s80 = sphi 0, %s78
      %s81 = sphi 0, %s80
      %s95 = sphi 0, %s81
      %s101 = sphi 0, %s103
      %s104 = sphi 0, %s101
      %s105 = sphi 0, %s104
      %s121 = sphi 0, %s105
    $region4: #{_residual_fc_add.1} parent=1 // loop_header_branch
      %21 = sbr.rel (%p19) target = $region8
    $region5: #{_residual_fc_add.1} parent=1 // loop_body
      %s23 = ssub.s32 %s18, 1
      %s24 = ssub.s32 %s18, 2
      %s25 = sadd.s32 %s18, 1
      %s26 = ssub.s32 %s18, %s25
      %p27 = scmp.eq.s32.totalorder %s26, 0
      %s29 = sadd.s32 %s28, 1
      %s30 = scalar_select %p27, %s28, %s29
      %p33 = pneg %p27
      %p34 = scmp.eq.s32.totalorder %s18, 1
      %p35 = por %p33, %p34
      %p36 = scmp.ne.s32.totalorder %s28, %s31
      %p37 = scmp.eq.s32.totalorder %s18, 0
      %p38 = por %p36, %p37
      %p39 = scmp.ne.s32.totalorder %s28, %s31
      %p40 = scmp.eq.s32.totalorder %s23, 1
      %p41 = por %p39, %p40
      %p42 = scmp.ne.s32.totalorder %s31, %s32
      %p43 = scmp.eq.s32.totalorder %s23, 0
      %p44 = por %p42, %p43
      %p45 = scmp.ne.s32.totalorder %s31, %s32
      %p46 = scmp.eq.s32.totalorder %s24, 1
      %p47 = por %p45, %p46
      %p49 = scmp.ne.s32.totalorder %s32, %s48
      %p50 = scmp.eq.s32.totalorder %s24, 0
      %p51 = por %p49, %p50
      %s52 = ssub.s32 %s18, %s25
      %p53 = scmp.eq.s32.totalorder %s52, 0
      %s55 = sadd.s32 %s54, 1
      %s56 = scalar_select %p53, %s54, %s55
      %p59 = pneg %p53
      %p60 = scmp.eq.s32.totalorder %s18, 1
      %p61 = por %p59, %p60
      %p62 = scmp.ne.s32.totalorder %s54, %s57
      %p63 = scmp.eq.s32.totalorder %s18, 0
      %p64 = por %p62, %p63
      %p65 = scmp.ne.s32.totalorder %s54, %s57
      %p66 = scmp.eq.s32.totalorder %s23, 1
      %p67 = por %p65, %p66
      %p68 = scmp.ne.s32.totalorder %s57, %s58
      %p69 = scmp.eq.s32.totalorder %s23, 0
      %p70 = por %p68, %p69
      %p71 = scmp.ne.s32.totalorder %s57, %s58
      %p72 = scmp.eq.s32.totalorder %s24, 1
      %p73 = por %p71, %p72
      %p75 = scmp.ne.s32.totalorder %s58, %s74
      %p76 = scmp.eq.s32.totalorder %s24, 0
      %p77 = por %p75, %p76
      %s79 = sadd.s32 %s78, 1
      %p82 = scmp.eq.s32.totalorder %s18, 1
      %p83 = scmp.ne.s32.totalorder %s78, %s80
      %p84 = scmp.eq.s32.totalorder %s18, 0
      %p85 = por %p83, %p84
      %p86 = scmp.ne.s32.totalorder %s78, %s80
      %p87 = scmp.eq.s32.totalorder %s23, 1
      %p88 = por %p86, %p87
      %p89 = scmp.ne.s32.totalorder %s80, %s81
      %p90 = scmp.eq.s32.totalorder %s23, 0
      %p91 = por %p89, %p90
      %p92 = scmp.ne.s32.totalorder %s80, %s81
      %p93 = scmp.eq.s32.totalorder %s24, 1
      %p94 = por %p92, %p93
      %p96 = scmp.ne.s32.totalorder %s81, %s95
      %p97 = scmp.eq.s32.totalorder %s24, 0
      %p98 = por %p96, %p97
      %s99 = ssub.s32 %s18, %s25
      %p100 = scmp.eq.s32.totalorder %s99, 0
      %s102 = sadd.s32 %s101, 1
      %s103 = scalar_select %p100, %s101, %s102
      %p106 = pneg %p100
      %p107 = scmp.eq.s32.totalorder %s18, 1
      %p108 = por %p106, %p107
      %p109 = scmp.ne.s32.totalorder %s101, %s104
      %p110 = scmp.eq.s32.totalorder %s18, 0
      %p111 = por %p109, %p110
      %p112 = scmp.ne.s32.totalorder %s101, %s104
      %p113 = scmp.eq.s32.totalorder %s23, 1
      %p114 = por %p112, %p113
      %p115 = scmp.ne.s32.totalorder %s104, %s105
      %p116 = scmp.eq.s32.totalorder %s23, 0
      %p117 = por %p115, %p116
      %p118 = scmp.ne.s32.totalorder %s104, %s105
      %p119 = scmp.eq.s32.totalorder %s24, 1
      %p120 = por %p118, %p119
      %p122 = scmp.ne.s32.totalorder %s105, %s121
      %p123 = scmp.eq.s32.totalorder %s24, 0
      %p124 = por %p122, %p123
      %p125 = scmp.le.s32.totalorder 1, %s18
      %p126 = scmp.lt.s32.totalorder %s18, 3
      %p127 = pnand %p125, %p126
      %p128 = pneg %p127
      // Predicated region
      $region9: #{_residual_fc_add.1} parent=5 // pred_check
        _
      $region10: #{_residual_fc_add.1} parent=5 // pred_check_branch
        %130 = sbr.rel (%p127) target = $region12
      $region11: #{_residual_fc_add.1} parent=5 // pred_region
        %s131 = ssub.s32 %s18, 1
        // Predicated region
        $region13: #{_residual_fc_add.1} parent=11 // pred_check
          %p132 = pneg %p91
        $region14: #{_residual_fc_add.1} parent=11 // pred_check_branch
          %134 = sbr.rel (%p132) target = $region16
        $region15: #{_residual_fc_add.1} parent=11 // pred_region
          %136 = vsyncadd [#allocation6], 0
          %s137 = sshll.u32 %s2, 4
          %s138 = int_to_ptr.hbm [resolvable:$true] %s137
          %s139 = sshll.u32 [#allocation7], 4
          %s140 = int_to_ptr.vmem [resolvable:$true] %s139
          %145 = dma.hbm_to_vmem [thread:$0]  %s138, 2048, %s140, [#allocation6], 128, 128, 8
        $region16: #{_residual_fc_add.1} parent=11 // pred_fallthru
          _
      $region12: #{_residual_fc_add.1} parent=5 // pred_fallthru
        _
      %p146 = scmp.lt.s32.totalorder %s18, 2
      // Predicated region
      $region17: #{_residual_fc_add.1} parent=5 // pred_check
        %p147 = pneg %p146
      $region18: #{_residual_fc_add.1} parent=5 // pred_check_branch
        %149 = sbr.rel (%p147) target = $region20
      $region19: #{_residual_fc_add.1} parent=5 // pred_region
        // Predicated region
        $region21: #{_residual_fc_add.1} parent=19 // pred_check
          %p150 = pneg %p38
        $region22: #{_residual_fc_add.1} parent=19 // pred_check_branch
          %152 = sbr.rel (%p150) target = $region24
        $region23: #{_residual_fc_add.1} parent=19 // pred_region
          %s153 = sand.u32 %s28, 1
          %s154 = scalar_lea.sflag [#allocation3], %s153
          %s155 = sand.u32 %s28, 1
          %s156 = smul.addr %s155, 8
          %s157 = scalar_lea.vmem [#allocation2], %s156
          %159 = vsyncadd %s154, 0
          %s160 = smul.addr %s18, 8
          %s161 = scalar_lea.hbm %s0, %s160
          %s163 = sshll.u32 %s161, 4
          %s164 = int_to_ptr.hbm [resolvable:$true] %s163
          %s165 = sshll.u32 %s157, 4
          %s166 = int_to_ptr.vmem [resolvable:$true] %s165
          %168 = dma.hbm_to_vmem [thread:$0]  %s164, 128, %s166, %s154
        $region24: #{_residual_fc_add.1} parent=19 // pred_fallthru
          _
        // Predicated region
        $region25: #{_residual_fc_add.1} parent=19 // pred_check
          %p169 = pneg %p64
        $region26: #{_residual_fc_add.1} parent=19 // pred_check_branch
          %171 = sbr.rel (%p169) target = $region28
        $region27: #{_residual_fc_add.1} parent=19 // pred_region
          %s172 = sand.u32 %s18, 1
          %s173 = scalar_lea.sflag [#allocation6], %s172
          %s174 = sand.u32 %s54, 1
          %s175 = smul.addr %s174, 8
          %s176 = scalar_lea.vmem [#allocation5], %s175
          %178 = vsyncadd %s173, 0
          %s179 = smul.addr %s18, 8
          %s180 = scalar_lea.hbm %s1, %s179
          %s182 = sshll.u32 %s180, 4
          %s183 = int_to_ptr.hbm [resolvable:$true] %s182
          %s184 = sshll.u32 %s176, 4
          %s185 = int_to_ptr.vmem [resolvable:$true] %s184
          %187 = dma.hbm_to_vmem [thread:$0]  %s183, 128, %s185, %s173
        $region28: #{_residual_fc_add.1} parent=19 // pred_fallthru
          _
      $region20: #{_residual_fc_add.1} parent=5 // pred_fallthru
        _
      %p188 = scmp.le.s32.totalorder 1, %s18
      %p189 = scmp.lt.s32.totalorder %s18, 3
      %p190 = pnand %p188, %p189
      %p191 = pneg %p190
      // Predicated region
      $region29: #{_residual_fc_add.1} parent=5 // pred_check
        _
      $region30: #{_residual_fc_add.1} parent=5 // pred_check_branch
        %193 = sbr.rel (%p190) target = $region32
      $region31: #{_residual_fc_add.1} parent=5 // pred_region
        %s194 = ssub.s32 %s18, 1
        %s195 = sand.u32 %s31, 1
        %s196 = scalar_lea.sflag [#allocation3], %s195
        %s197 = sand.u32 %s31, 1
        %s198 = smul.addr %s197, 8
        %s199 = scalar_lea.vmem [#allocation2], %s198
        // Predicated region
        $region33: #{_residual_fc_add.1} parent=31 // pred_check
          %p200 = pneg %p44
        $region34: #{_residual_fc_add.1} parent=31 // pred_check_branch
          %202 = sbr.rel (%p200) target = $region36
        $region35: #{_residual_fc_add.1} parent=31 // pred_region
          %204 = dma.done %s196, 128
        $region36: #{_residual_fc_add.1} parent=31 // pred_fallthru
          _
        %s205 = sand.u32 %s23, 1
        %s206 = scalar_lea.sflag [#allocation6], %s205
        %s207 = sand.u32 %s57, 1
        %s208 = smul.addr %s207, 8
        %s209 = scalar_lea.vmem [#allocation5], %s208
        // Predicated region
        $region37: #{_residual_fc_add.1} parent=31 // pred_check
          %p210 = pneg %p70
        $region38: #{_residual_fc_add.1} parent=31 // pred_check_branch
          %212 = sbr.rel (%p210) target = $region40
        $region39: #{_residual_fc_add.1} parent=31 // pred_region
          %214 = dma.done %s206, 128
        $region40: #{_residual_fc_add.1} parent=31 // pred_fallthru
          _
        // Predicated region
        $region41: #{_residual_fc_add.1} parent=31 // pred_check
          %p215 = pneg %p91
        $region42: #{_residual_fc_add.1} parent=31 // pred_check_branch
          %217 = sbr.rel (%p215) target = $region44
        $region43: #{_residual_fc_add.1} parent=31 // pred_region
          %219 = dma.done [#allocation6], 2048
        $region44: #{_residual_fc_add.1} parent=31 // pred_fallthru
          _
        %s220 = sand.u32 %s31, 1
        %s221 = scalar_lea.sflag [#allocation3], %s220
        %s222 = sand.u32 %s31, 1
        %s223 = smul.addr %s222, 8
        %s224 = scalar_lea.vmem [#allocation2], %s223
        %p225 = pneg %p44
        %p226 = pneg %p41
        %s227 = sand.u32 %s23, 1
        %s228 = scalar_lea.sflag [#allocation6], %s227
        %s229 = sand.u32 %s57, 1
        %s230 = smul.addr %s229, 8
        %s231 = scalar_lea.vmem [#allocation5], %s230
        %p232 = pneg %p70
        %p233 = pneg %p67
        %p234 = pneg %p91
        %p235 = pneg %p88
        %p236 = pneg %p117
        %p237 = pneg %p114
        %s238 = sand.u32 %s104, 1
        %s239 = scalar_lea.sflag [#allocation4], %s238
        %s240 = sand.u32 %s104, 1
        %s241 = smul.addr %s240, 8
        %s242 = scalar_lea.vmem [#allocation8], %s241
        %v243 = vld [vmem:[%s209] sm:$0xff]
        %v244 = vld [vmem:[#allocation7] sm:$0xff]
        %v245 = vld [vmem:[#allocation7 + $0x8] sm:$0xff]
        %v246 = vld [vmem:[#allocation7 + $0x10] sm:$0xff]
        %v247 = vld [vmem:[#allocation7 + $0x18] sm:$0xff]
        %v248 = vld [vmem:[#allocation7 + $0x20] sm:$0xff]
        %v249 = vld [vmem:[#allocation7 + $0x28] sm:$0xff]
        %v250 = vld [vmem:[#allocation7 + $0x30] sm:$0xff]
        %v251 = vld [vmem:[#allocation7 + $0x38] sm:$0xff]
        %v252 = vld [vmem:[#allocation7 + $0x40] sm:$0xff]
        %v253 = vld [vmem:[#allocation7 + $0x48] sm:$0xff]
        %v254 = vld [vmem:[#allocation7 + $0x50] sm:$0xff]
        %v255 = vld [vmem:[#allocation7 + $0x58] sm:$0xff]
        %v256 = vld [vmem:[#allocation7 + $0x60] sm:$0xff]
        %v257 = vld [vmem:[#allocation7 + $0x68] sm:$0xff]
        %v258 = vld [vmem:[#allocation7 + $0x70] sm:$0xff]
        %v259 = vld [vmem:[#allocation7 + $0x78] sm:$0xff]
        %260 = vmatpush.msra.mxu0 %v259
        %261 = vmatpush.msra.mxu0 %v258
        %262 = vmatpush.msra.mxu0 %v257
        %263 = vmatpush.msra.mxu0 %v256
        %264 = vmatpush.msra.mxu0 %v255
        %265 = vmatpush.msra.mxu0 %v254
        %266 = vmatpush.msra.mxu0 %v253
        %267 = vmatpush.msra.mxu0 %v252
        %268 = vmatpush.msra.mxu0 %v251
        %269 = vmatpush.msra.mxu0 %v250
        %270 = vmatpush.msra.mxu0 %v249
        %271 = vmatpush.msra.mxu0 %v248
        %272 = vmatpush.msra.mxu0 %v247
        %273 = vmatpush.msra.mxu0 %v246
        %274 = vmatpush.msra.mxu0 %v245
        %275 = vmatpush.msra.mxu0 %v244
        %276 = vmatmul.f32.gmra.mxu0 %v243
        %v277 = vpop.f32.mrf.mxu0
        %v278 = vadd.f32 0.0, %v277
        %279 = vdwg.mxu0
        %v280 = vld [vmem:[%s199] sm:$0xff]
        %v281 = vadd.f32 %v280, %v278
        %282 = vst [vmem:[%s242] sm:$0xff] %v281
        %s283 = sand.u32 %s104, 1
        %s284 = scalar_lea.sflag [#allocation4], %s283
        %s285 = sand.u32 %s104, 1
        %s286 = smul.addr %s285, 8
        %s287 = scalar_lea.vmem [#allocation8], %s286
        // Predicated region
        $region45: #{_residual_fc_add.1} parent=31 // pred_check
          %p288 = pneg %p114
        $region46: #{_residual_fc_add.1} parent=31 // pred_check_branch
          %290 = sbr.rel (%p288) target = $region48
        $region47: #{_residual_fc_add.1} parent=31 // pred_region
          %292 = vsyncadd %s284, 0
          %s293 = smul.addr %s23, 8
          %s294 = scalar_lea.hbm %s3, %s293
          %s296 = sshll.u32 %s287, 4
          %s297 = int_to_ptr.vmem [resolvable:$true] %s296
          %s298 = sshll.u32 %s294, 4
          %s299 = int_to_ptr.hbm [resolvable:$true] %s298
          %301 = dma.vmem_to_hbm [thread:$0]  %s297, 128, %s299, %s284
        $region48: #{_residual_fc_add.1} parent=31 // pred_fallthru
          _
      $region32: #{_residual_fc_add.1} parent=5 // pred_fallthru
        _
      %p302 = scmp.le.s32.totalorder 2, %s18
      // Predicated region
      $region49: #{_residual_fc_add.1} parent=5 // pred_check
        %p303 = pneg %p302
      $region50: #{_residual_fc_add.1} parent=5 // pred_check_branch
        %305 = sbr.rel (%p303) target = $region52
      $region51: #{_residual_fc_add.1} parent=5 // pred_region
        %s306 = ssub.s32 %s18, 2
        // Predicated region
        $region53: #{_residual_fc_add.1} parent=51 // pred_check
          %p307 = pneg %p120
        $region54: #{_residual_fc_add.1} parent=51 // pred_check_branch
          %309 = sbr.rel (%p307) target = $region56
        $region55: #{_residual_fc_add.1} parent=51 // pred_region
          %s310 = sand.u32 %s105, 1
          %s311 = scalar_lea.sflag [#allocation4], %s310
          %s312 = sand.u32 %s105, 1
          %s313 = smul.addr %s312, 8
          %s314 = scalar_lea.vmem [#allocation8], %s313
          %316 = dma.done %s311, 128
        $region56: #{_residual_fc_add.1} parent=51 // pred_fallthru
          _
      $region52: #{_residual_fc_add.1} parent=5 // pred_fallthru
        _
    $region6: #{_residual_fc_add.1} parent=1 // loop_footer
      %s22 = sadd.s32 1, %s18
    $region7: #{_residual_fc_add.1} parent=1 // loop_footer_branch
      %17 = sbr.rel target = $region3
    $region8: #{_residual_fc_add.1} parent=1 // loop_exit
      _
    %317 = vsyncpa [#allocation3], 1
    %s318 = scalar_lea.sflag [#allocation3], 1
    %319 = vsyncpa %s318, 1
    %320 = vsyncpa [#allocation6], 1
    %s321 = scalar_lea.sflag [#allocation6], 1
    %322 = vsyncpa %s321, 1
    %323 = vsyncpa [#allocation4], 1
    %s324 = scalar_lea.sflag [#allocation4], 1
    %325 = vsyncpa %s324, 1

</llo_original>
